<compile_context>
chip_gen: v6e
topology: v6e:2x2x1
jax: 0.10.0
libtpu: 0.0.40
codegen_flags: <defaults>
</compile_context>

<pallas_src>
import functools
import math

import jax
import jax.numpy as jnp
from jax.experimental import pallas as pl
from jax.experimental.pallas import tpu as pltpu

LANE = 128
_KERNEL_ACTS = ("relu", "gelu", "gelu_tanh")
_VMEM_LIMIT_BYTES = 32 * 1024 * 1024
_TARGET_BLOCK_BYTES = 4 << 20


def _sublane_pack(dtype) -> int:
    """Rows per packed sublane tile: 8 (4-byte), 16 (2-byte), 32 (1-byte)."""
    itemsize = jnp.dtype(dtype).itemsize
    return max(8, 32 // max(itemsize, 1))


def _num_tensorcores() -> int:
    """Best-effort TensorCores-per-chip: 2 on v7x, 1 on v5e/v6e."""
    try:
        kind = jax.devices()[0].device_kind.lower()
    except Exception:  # pragma: no cover - no device info available
        return 1
    return 2 if "7" in kind else 1


def _apply_act(x, act_layer: str, approximate_gelu: bool):
    if act_layer == "relu":
        return jnp.maximum(x, 0)
    if act_layer == "gelu":
        if approximate_gelu:
            # tanh-approx routes the transcendental to the EUP slot (free on
            # v6e/v7x, native bf16); ~1e-3 max-abs delta vs nn.GELU exact.
            return jax.nn.gelu(x, approximate=True)
        # PyTorch nn.GELU default is the exact erf form; compute in f32.
        x32 = x.astype(jnp.float32)
        return 0.5 * x32 * (1.0 + jax.lax.erf(x32 * (1.0 / math.sqrt(2.0))))
    if act_layer == "gelu_tanh":
        return jax.nn.gelu(x, approximate=True)
    return x


def _simple_block_kernel(w_ref, o_ref, *, act_layer: str,
                         approximate_gelu: bool):
    o_ref[...] = _apply_act(w_ref[...], act_layer,
                            approximate_gelu).astype(o_ref.dtype)


def _pick_block_rows(rows: int, bytes_per_row: int, pack: int,
                     target_bytes: int, num_cores: int) -> int:
    """Largest per-block row count that (a) stays near the byte target,
    (b) keeps stores unmasked (multiple of the packed sublane tile, or full
    extent), (c) divides `rows` so the last block is full, and (d) yields a
    block count divisible by num_cores (>= 4 blocks/core when possible)."""
    max_rows = max(1, target_bytes // bytes_per_row)
    if rows <= max_rows and num_cores == 1:
        return rows  # one full block, grid of 1

    divisors = set()
    d = 1
    while d * d <= rows:
        if rows % d == 0:
            divisors.add(d)
            divisors.add(rows // d)
        d += 1

    def ok(cand: int, min_blocks: int) -> bool:
        if cand > max_rows:
            return False
        if cand % pack != 0 and cand != rows:
            return False
        nblk = rows // cand
        return (nblk % num_cores == 0) and (nblk >= min_blocks)

    for min_blocks in (4 * num_cores, num_cores):
        cands = [c for c in divisors if ok(c, min_blocks)]
        if cands:
            return max(cands)

    # Fallback: byte-derived, packed-aligned; last block may be partial.
    fallback = (max_rows // pack) * pack
    if fallback == 0:
        fallback = pack
    return min(rows, fallback)


def simple_block(w: jax.Array, act_layer: str = "identity", *,
                 approximate_gelu: bool = False,
                 donate: bool = False,
                 target_block_bytes: int = _TARGET_BLOCK_BYTES) -> jax.Array:
    """Pallas implementation of SimpleBlock.forward(w) == act(w)."""
    # TODO(synk): the full ACTIVATION_LAYERS registry is not available here;
    # identity (the module default) and any unknown name fall back to
    # identity, mirroring `.get(act_layer, nn.Identity)`.  Identity launches
    # no kernel at all.
    if act_layer not in _KERNEL_ACTS:
        return w

    orig_shape = w.shape
    dtype = w.dtype
    n = w.size
    if n == 0:
        return w

    itemsize = jnp.dtype(dtype).itemsize
    rem = n % LANE
    n_aligned = n - rem

    if n_aligned == 0:
        # Sub-lane-row tensor: a kernel launch is pure overhead.
        return _apply_act(w, act_layer, approximate_gelu).astype(dtype)

    flat = w.reshape(-1)
    if rem:
        head = flat[:n_aligned]
        tail = flat[n_aligned:]
    else:
        head = flat
        tail = None

    # Widest lane-dense column count dividing the aligned prefix -> wide
    # unmasked vector stores and few, large contiguous DMAs.
    cols = LANE
    for c in (8192, 4096, 2048, 1024, 512, 256):
        if n_aligned % c == 0:
            cols = c
            break
    rows = n_aligned // cols
    slab = head.reshape(rows, cols)

    pack = _sublane_pack(dtype)
    num_cores = _num_tensorcores()
    block_rows = _pick_block_rows(rows, cols * itemsize, pack,
                                  target_block_bytes, num_cores)
    num_blocks = pl.cdiv(rows, block_rows)

    use_core_split = (num_cores > 1
                      and rows % block_rows == 0
                      and num_blocks % num_cores == 0
                      and num_blocks >= num_cores)

    flops = n if act_layer == "relu" else 10 * n
    transcendentals = 0 if act_layer == "relu" else n

    def build(core_split: bool):
        if core_split:
            bpc = num_blocks // num_cores
            grid = (num_cores, bpc)
            imap = lambda c, i: (c * bpc + i, 0)
            semantics = (pltpu.CORE_PARALLEL, pltpu.ARBITRARY)
        else:
            grid = (num_blocks,)
            imap = lambda i: (i, 0)
            semantics = ("parallel",)
        return pl.pallas_call(
            functools.partial(_simple_block_kernel, act_layer=act_layer,
                              approximate_gelu=approximate_gelu),
            out_shape=jax.ShapeDtypeStruct((rows, cols), dtype),
            grid_spec=pltpu.PrefetchScalarGridSpec(
                num_scalar_prefetch=0,
                grid=grid,
                in_specs=[pl.BlockSpec((block_rows, cols), imap)],
                out_specs=pl.BlockSpec((block_rows, cols), imap)),
            compiler_params=pltpu.CompilerParams(
                dimension_semantics=semantics,
                vmem_limit_bytes=_VMEM_LIMIT_BYTES),
            # Alias only when the caller truly donates w; otherwise XLA would
            # insert a defensive full-tensor copy (a whole extra HBM pass).
            input_output_aliases=({0: 0} if donate else {}),
            cost_estimate=pl.CostEstimate(
                flops=flops,
                transcendentals=transcendentals,
                bytes_accessed=2 * n_aligned * itemsize),
        )

    if use_core_split:
        try:
            out = build(True)(slab)
        except Exception:
            # TODO(synk): CORE_PARALLEL lowering unavailable on this part;
            # fall back to the single-core stream.
            out = build(False)(slab)
    else:
        out = build(False)(slab)

    if tail is not None:
        tail_out = _apply_act(tail, act_layer, approximate_gelu).astype(dtype)
        return jnp.concatenate([out.reshape(-1), tail_out]).reshape(orig_shape)
    return out.reshape(orig_shape)


if __name__ == "__main__":
    key = jax.random.PRNGKey(0)
    # Shape consistent with a hypernet weight tensor fed through SimpleBlock.
    w = jax.random.normal(key, (2, 4, 16, 16), dtype=jnp.float32)

    # Default path: identity activation -> returned as-is, no kernel launch.
    y_id = jax.block_until_ready(simple_block(w))
    assert y_id.shape == w.shape and y_id.dtype == w.dtype
    assert bool(jnp.allclose(y_id, w)), "identity activation mismatch"

    # Non-trivial activation exercises the Pallas kernel (128-multiple path).
    y_relu = jax.block_until_ready(simple_block(w, act_layer="relu"))
    assert bool(jnp.allclose(y_relu, jnp.maximum(w, 0.0))), "relu mismatch"

    # Exact-erf gelu matches jax.nn.gelu(approximate=False) == nn.GELU default.
    y_gelu = jax.block_until_ready(simple_block(w, act_layer="gelu"))
    assert bool(jnp.allclose(y_gelu, jax.nn.gelu(w, approximate=False),
                             atol=1e-5, rtol=1e-5)), "gelu mismatch"

    # Ragged size exercises the aligned-prefix + jnp-tail path (no pad/unpad).
    w2 = jax.random.normal(jax.random.PRNGKey(1), (5, 131), dtype=jnp.float32)
    y2 = jax.block_until_ready(simple_block(w2, act_layer="relu"))
    assert y2.shape == w2.shape
    assert bool(jnp.allclose(y2, jnp.maximum(w2, 0.0))), "ragged relu mismatch"

    # Tiny (<128 elements) tensor takes the no-kernel path.
    w3 = jax.random.normal(jax.random.PRNGKey(2), (3, 5, 7), dtype=jnp.float32)
    y3 = jax.block_until_ready(simple_block(w3, act_layer="relu"))
    assert bool(jnp.allclose(y3, jnp.maximum(w3, 0.0))), "tiny relu mismatch"

    # bf16 path checks dtype handling / packed-sublane alignment.
    w4 = jax.random.normal(jax.random.PRNGKey(3), (8, 32, 32),
                           dtype=jnp.bfloat16)
    y4 = jax.block_until_ready(simple_block(w4, act_layer="relu"))
    assert y4.dtype == jnp.bfloat16 and y4.shape == w4.shape
    assert bool(jnp.allclose(y4.astype(jnp.float32),
                             jnp.maximum(w4.astype(jnp.float32), 0.0)))

    print("KERNEL_OK")
</pallas_src>

<mosaic_0001>
module attributes {stable_mosaic.version = 11 : i64} {
  func.func @_simple_block_kernel(%arg0: i32, %arg1: memref<1x2048xf32, #tpu.memory_space<vmem>>, %arg2: memref<1x2048xf32, #tpu.memory_space<vmem>>) attributes {dimension_semantics = [#tpu.dimension_semantics<parallel>], iteration_bounds = array<i64: 1>, scalar_prefetch = 0 : i64, scratch_operands = 0 : i64, tpu.core_type = #tpu.core_type<tc>, window_params = [{transform_indices = @transform_0, window_bounds = array<i64: 1, 2048>}, {transform_indices = @transform_1, window_bounds = array<i64: 1, 2048>}]} {
    %c0 = arith.constant 0 : index
    %c0_0 = arith.constant 0 : index
    %0 = vector.load %arg1[%c0, %c0_0] : memref<1x2048xf32, #tpu.memory_space<vmem>>, vector<1x2048xf32>
    %cst = arith.constant 0.000000e+00 : f32
    %1 = vector.broadcast %cst : f32 to vector<1x2048xf32>
    %2 = arith.maximumf %0, %1 : vector<1x2048xf32>
    %c0_1 = arith.constant 0 : index
    %c0_2 = arith.constant 0 : index
    %3 = vector.load %arg2[%c0_1, %c0_2] : memref<1x2048xf32, #tpu.memory_space<vmem>>, vector<1x2048xf32>
    tpu.vector_store %arg2[%c0_1, %c0_2], %2 {strides = array<i32>} : memref<1x2048xf32, #tpu.memory_space<vmem>>, vector<1x2048xf32>,
    return
  }
  func.func @transform_0(%arg0: i32) -> (i32, i32) {
    %c0_i32 = arith.constant 0 : i32
    %c0_i32_0 = arith.constant 0 : i32
    return %arg0, %c0_i32 : i32, i32
  }
  func.func @transform_1(%arg0: i32) -> (i32, i32) {
    %c0_i32 = arith.constant 0 : i32
    %c0_i32_0 = arith.constant 0 : i32
    return %arg0, %c0_i32 : i32, i32
  }
}

</mosaic_0001>

<llo_original>
// kernel: tpu_custom_call.1
$region0: #{tpu_custom_call.1}
  #allocation0 [shape = 'u32[]', space=smem, size = 0x4, offset = 0x4, fixed_abs, tag = 'smem constant byte address 0x4 - core index']
  #allocation1 [shape = 'u32[144,128]{1,0:T(1,128)}', space=vmem, size = 0x12000, scoped, tag = 'internal scratch']
  %s0 = inlined_call_operand.hbm [shape: f32[1,2048], index: 0, kind: input, shape index: {}]
  %s1 = inlined_call_operand.hbm [shape: f32[1,2048], index: 1, kind: output, shape index: {}]
  %s2 = sld [smem:[#allocation0]]
  $region18: #{tpu_custom_call.1} parent=0
    _
  %s4 = ssub.s32 1, %s2
  %s5 = scalar_select 0, %s4, %s2
  $region1: #{tpu_custom_call.1} parent=0
    #allocation2 [shape = 'u8[8192]{0}', space=vmem, size = 0x2000, scoped, tag = 'input window, operand 0, single buffered']
    #allocation3 [shape = 's32[1]{0}', space=sflag, size = 0x4, scoped, tag = 'scoped memory for tpu_custom_call.1']
    #allocation4 [shape = 's32[1]{0}', space=sflag, size = 0x4, scoped, tag = 'scoped memory for tpu_custom_call.1']
    #allocation5 [shape = 'u8[8192]{0}', space=vmem, size = 0x2000, scoped, tag = 'output window, operand 0, single buffered']
    %6 = vsyncpa [#allocation3], 0
    %7 = vsyncpa [#allocation4], 0
    // Predicated region
    $region2: #{tpu_custom_call.1} parent=1 // pred_check
      _
    $region3: #{tpu_custom_call.1} parent=1 // pred_check_branch
      %9 = sbr.rel (0) target = $region5
    $region4: #{tpu_custom_call.1} parent=1 // pred_region
      %s11 = ssub.s32 256, 256
      %12 = vsyncadd [#allocation3], %s11
      %s14 = sshll.u32 [#allocation2], 4
      %s15 = int_to_ptr.vmem [resolvable:$true] %s14
      %17 = dma.hbm_to_vmem [thread:$0]  %s0, 256, %s15, [#allocation3]
    $region5: #{tpu_custom_call.1} parent=1 // pred_fallthru
      _
    // Predicated region
    $region6: #{tpu_custom_call.1} parent=1 // pred_check
      _
    $region7: #{tpu_custom_call.1} parent=1 // pred_check_branch
      %19 = sbr.rel (0) target = $region9
    $region8: #{tpu_custom_call.1} parent=1 // pred_region
      %20 = dma.done [#allocation3], 256
    $region9: #{tpu_custom_call.1} parent=1 // pred_fallthru
      _
    %v21 = vld [vmem:[#allocation2] sm:$0xff]
    %v22 = vld [vmem:[#allocation2 + $0x8] sm:$0xff]
    %v23 = vmax.f32 %v21, 0.0
    %v24 = vmax.f32 %v22, 0.0
    %25 = vst [vmem:[#allocation5] sm:$0xff] %v23
    %26 = vst [vmem:[#allocation5 + $0x8] sm:$0xff] %v24
    // Predicated region
    $region10: #{tpu_custom_call.1} parent=1 // pred_check
      _
    $region11: #{tpu_custom_call.1} parent=1 // pred_check_branch
      %28 = sbr.rel (0) target = $region13
    $region12: #{tpu_custom_call.1} parent=1 // pred_region
      %s30 = ssub.s32 256, 256
      %31 = vsyncadd [#allocation4], %s30
      %s33 = sshll.u32 [#allocation5], 4
      %s34 = int_to_ptr.vmem [resolvable:$true] %s33
      %36 = dma.vmem_to_hbm [thread:$0]  %s34, 256, %s1, [#allocation4]
    $region13: #{tpu_custom_call.1} parent=1 // pred_fallthru
      _
    // Predicated region
    $region14: #{tpu_custom_call.1} parent=1 // pred_check
      _
    $region15: #{tpu_custom_call.1} parent=1 // pred_check_branch
      %38 = sbr.rel (0) target = $region17
    $region16: #{tpu_custom_call.1} parent=1 // pred_region
      %39 = dma.done [#allocation4], 256
    $region17: #{tpu_custom_call.1} parent=1 // pred_fallthru
      _
    %40 = vsyncpa [#allocation3], 1
    %41 = vsyncpa [#allocation4], 1

</llo_original>
